<compile_context>
chip_gen: v7x
topology: tpu7x:2x2x1
jax: 0.10.0
libtpu: 0.0.40
codegen_flags: <defaults>
</compile_context>

<pallas_src>
import functools

import jax
import jax.numpy as jnp
from jax.experimental import pallas as pl
from jax.experimental.pallas import tpu as pltpu

_LANE = 128
_MIB = 1024 * 1024


def _scale_kernel(x_ref, o_ref, *, rate):
    # True divide for bit-parity with PyTorch's `feature / rate`.  Sub-32-bit
    # inputs are upcast to f32 for the divide and rounded back; the extra
    # VPU/EUP work hides completely under DMA in this memory-bound kernel.
    x = x_ref[...]
    o_ref[...] = (x.astype(jnp.float32) / rate).astype(o_ref.dtype)


def _launch(x, rate, block_shape, index_map, grid, block_vmem_bytes,
            donate, core_parallel):
    kernel = functools.partial(_scale_kernel, rate=rate)
    # 2 buffers each for the input and output block (depth-2 pipelining fully
    # overlaps a streaming elementwise kernel) + ~2 MiB headroom for Mosaic
    # internals.  Floor at 16 MiB (the v5e default) so tiny launches never
    # shrink the scoped window; cap at 64 MiB (v7x physical VMEM per TC).
    vmem_limit = int(min(64 * _MIB,
                         max(16 * _MIB, 4 * block_vmem_bytes + 2 * _MIB)))
    # core_parallel=True shards the grid axis across v7x's two TensorCores;
    # plain "parallel" is kept as the portable default for v5e/v6e (1 TC).
    semantics = (pltpu.CORE_PARALLEL,) if core_parallel else ("parallel",)
    return pl.pallas_call(
        kernel,
        out_shape=jax.ShapeDtypeStruct(x.shape, x.dtype),
        grid_spec=pltpu.PrefetchScalarGridSpec(
            num_scalar_prefetch=0,
            grid=grid,
            in_specs=[pl.BlockSpec(block_shape, index_map)],
            out_specs=pl.BlockSpec(block_shape, index_map),
        ),
        compiler_params=pltpu.CompilerParams(
            dimension_semantics=semantics,
            vmem_limit_bytes=vmem_limit,
        ),
        input_output_aliases=({0: 0} if donate else {}),
    )(x)


def scaler_forward(feature, rate, training=True, *,
                   block_bytes=4 * _MIB, donate=False, core_parallel=False):
    """Pallas equivalent of Scaler.forward.

    feature       : jnp array of any shape/rank (NCHW activations in ResNet).
    rate          : python float (static).
    training      : python bool (static). Eval mode is a strict identity.
    block_bytes   : target VMEM bytes per (logical) block; 4 MiB default.
    donate        : alias output onto input HBM buffer (caller donates at jit).
    core_parallel : set True on v7x (2 TensorCores/chip) to split the grid
                    across cores; leave False on v5e/v6e.
    """
    if not training:
        return feature  # identity, no kernel launch

    n = feature.size
    if n == 0:
        return feature

    rate = float(rate)
    dtype = feature.dtype
    itemsize = jnp.dtype(dtype).itemsize
    # Packed sublane tile: 8 for 4-byte, 16 for 2-byte, 32 for 1-byte dtypes.
    sub_pack = max(8, 32 // itemsize)

    if n % _LANE == 0:
        # Lane-dense slab: reshape of a contiguous array is free (no copy),
        # and a (rows, 128) layout keeps every store a full unmasked vst.
        rows = n // _LANE
        br = (block_bytes // (_LANE * itemsize)) // sub_pack * sub_pack
        br = max(sub_pack, br)
        if br >= rows:
            br = rows  # full-extent block: exempt from the (8,128) rule
        x2d = feature.reshape(rows, _LANE)
        blk_vmem = br * _LANE * itemsize
        out = _launch(x2d, rate, (br, _LANE), lambda i: (i, 0),
                      (pl.cdiv(rows, br),), blk_vmem, donate, core_parallel)
        return out.reshape(feature.shape)

    # Fallback (element count not a multiple of 128, rare for ResNet): grid
    # over the collapsed leading dims, keep the last two dims full-extent.
    # VMEM tiles pad the last two dims to (sub_pack, 128), so size the block
    # from the *padded* footprint to avoid blowing past the scoped-VMEM limit.
    # TODO(synk): lane-sparse last dims (< 128) still pay masked vst.msk stores;
    # a one-time pad to a 128-multiple would fix that at the cost of a copy.
    if feature.ndim >= 2:
        h, w = int(feature.shape[-2]), int(feature.shape[-1])
    else:
        h, w = 1, int(n)
    lead = n // (h * w)
    pad_h = -(-h // sub_pack) * sub_pack
    pad_w = -(-w // _LANE) * _LANE
    padded_row_bytes = pad_h * pad_w * itemsize
    bl = max(1, block_bytes // padded_row_bytes)
    bl = min(bl, lead)
    x3 = feature.reshape(lead, h, w)
    blk_vmem = bl * padded_row_bytes
    out = _launch(x3, rate, (bl, h, w), lambda i: (i, 0, 0),
                  (pl.cdiv(lead, bl),), blk_vmem, donate, core_parallel)
    return out.reshape(feature.shape)


if __name__ == "__main__":
    k0, k1, k2, k3 = jax.random.split(jax.random.PRNGKey(0), 4)

    # --- Test 1: spec shapes (NCHW 2x4x16x16), f32, rate=0.5, train + eval ---
    rate = 0.5
    x = jax.random.normal(k0, (2, 4, 16, 16), dtype=jnp.float32)
    y_train = jax.block_until_ready(scaler_forward(x, rate, training=True))
    y_eval = jax.block_until_ready(scaler_forward(x, rate, training=False))
    assert y_train.shape == x.shape and y_train.dtype == x.dtype
    assert jnp.allclose(y_train, x / rate, rtol=1e-6, atol=1e-6)
    assert jnp.array_equal(y_eval, x)

    # --- Test 2: multi-block grid with a ragged final block, non-trivial rate
    #     (true divide in-kernel, compared against host-side divide). ---
    rate2 = 3.0
    x2 = jax.random.normal(k1, (2, 3, 16, 32), dtype=jnp.float32)  # 3072 elems -> 24 rows
    y2 = jax.block_until_ready(
        scaler_forward(x2, rate2, training=True,
                       block_bytes=16 * _LANE * 4))  # 16-row blocks -> grid=2, ragged tail
    assert jnp.allclose(y2, x2 / rate2, rtol=1e-6, atol=1e-6)

    # --- Test 3: bf16 (16-row sublane packing, f32 internal divide) + donated
    #     aliased output under jit. ---
    xb = jax.random.normal(k2, (2, 4, 16, 16), dtype=jnp.bfloat16)
    ref_b = xb.astype(jnp.float32) / rate
    f = jax.jit(lambda a: scaler_forward(a, rate, training=True, donate=True),
                donate_argnums=0)
    yb = jax.block_until_ready(f(jnp.array(xb)))  # donate a private copy
    assert yb.dtype == jnp.bfloat16 and yb.shape == xb.shape
    assert jnp.allclose(yb.astype(jnp.float32), ref_b, rtol=2e-2, atol=2e-2)

    # --- Test 4: fallback path (element count not a multiple of 128), with a
    #     multi-step grid to exercise the padded-tile VMEM sizing fix. ---
    rate4 = 0.25
    x4 = jax.random.normal(k3, (2, 3, 5, 7), dtype=jnp.float32)  # 210 elems
    y4 = jax.block_until_ready(
        scaler_forward(x4, rate4, training=True, block_bytes=4096))  # bl=1 -> grid=6
    assert jnp.allclose(y4, x4 / rate4, rtol=1e-6, atol=1e-6)

    print("KERNEL_OK")
</pallas_src>

<mosaic_0001>
module attributes {stable_mosaic.version = 11 : i64} {
  func.func @_scale_kernel(%arg0: i32, %arg1: memref<16x128xf32, #tpu.memory_space<vmem>>, %arg2: memref<16x128xf32, #tpu.memory_space<vmem>>) attributes {dimension_semantics = [#tpu.dimension_semantics<parallel>], iteration_bounds = array<i64: 1>, scalar_prefetch = 0 : i64, scratch_operands = 0 : i64, tpu.core_type = #tpu.core_type<tc>, window_params = [{transform_indices = @transform_0, window_bounds = array<i64: 16, 128>}, {transform_indices = @transform_1, window_bounds = array<i64: 16, 128>}]} {
    %c0 = arith.constant 0 : index
    %c0_0 = arith.constant 0 : index
    %0 = vector.load %arg1[%c0, %c0_0] : memref<16x128xf32, #tpu.memory_space<vmem>>, vector<16x128xf32>
    %cst = arith.constant 5.000000e-01 : f32
    %1 = vector.broadcast %cst : f32 to vector<16x128xf32>
    %2 = arith.divf %0, %1 : vector<16x128xf32>
    %c0_1 = arith.constant 0 : index
    %c0_2 = arith.constant 0 : index
    %3 = vector.load %arg2[%c0_1, %c0_2] : memref<16x128xf32, #tpu.memory_space<vmem>>, vector<16x128xf32>
    tpu.vector_store %arg2[%c0_1, %c0_2], %2 {strides = array<i32>} : memref<16x128xf32, #tpu.memory_space<vmem>>, vector<16x128xf32>,
    return
  }
  func.func @transform_0(%arg0: i32) -> (i32, i32) {
    %c0_i32 = arith.constant 0 : i32
    %c0_i32_0 = arith.constant 0 : i32
    return %arg0, %c0_i32 : i32, i32
  }
  func.func @transform_1(%arg0: i32) -> (i32, i32) {
    %c0_i32 = arith.constant 0 : i32
    %c0_i32_0 = arith.constant 0 : i32
    return %arg0, %c0_i32 : i32, i32
  }
}

</mosaic_0001>

<llo_original>
// kernel: tpu_custom_call.1
$region0: #{tpu_custom_call.1}
  #allocation0 [shape = 'u32[]', space=smem, size = 0x4, offset = 0x4, fixed_abs, tag = 'smem constant byte address 0x4 - core index']
  #allocation1 [shape = 'u32[144,128]{1,0:T(1,128)}', space=vmem, size = 0x12000, scoped, tag = 'internal scratch']
  %s0 = inlined_call_operand.hbm [shape: f32[16,128], index: 0, kind: input, shape index: {}]
  %s1 = inlined_call_operand.hbm [shape: f32[16,128], index: 1, kind: output, shape index: {}]
  %s2 = sld [smem:[#allocation0]]
  $region18: #{tpu_custom_call.1} parent=0
    _
  %s4 = ssub.s32 1, %s2
  %s5 = scalar_select 0, %s4, %s2
  $region1: #{tpu_custom_call.1} parent=0
    #allocation2 [shape = 'u8[8192]{0}', space=vmem, size = 0x2000, scoped, tag = 'input window, operand 0, single buffered']
    #allocation3 [shape = 's32[1]{0}', space=sflag, size = 0x4, scoped, tag = 'scoped memory for tpu_custom_call.1']
    #allocation4 [shape = 's32[1]{0}', space=sflag, size = 0x4, scoped, tag = 'scoped memory for tpu_custom_call.1']
    #allocation5 [shape = 'u8[8192]{0}', space=vmem, size = 0x2000, scoped, tag = 'output window, operand 0, single buffered']
    %6 = vsyncpa [#allocation3], 0
    %7 = vsyncpa [#allocation4], 0
    // Predicated region
    $region2: #{tpu_custom_call.1} parent=1 // pred_check
      _
    $region3: #{tpu_custom_call.1} parent=1 // pred_check_branch
      %9 = sbr.rel (0) target = $region5
    $region4: #{tpu_custom_call.1} parent=1 // pred_region
      %s11 = ssub.s32 256, 256
      %12 = vsyncadd [#allocation3], %s11
      %s13 = sshll.u32 [#allocation2], 4
      %s14 = int_to_ptr.vmem [resolvable:$true] %s13
      %19 = dma.hbm_to_vmem [thread:$0]  %s0, 256, %s14, [#allocation3], 128, 128, 8
    $region5: #{tpu_custom_call.1} parent=1 // pred_fallthru
      _
    // Predicated region
    $region6: #{tpu_custom_call.1} parent=1 // pred_check
      _
    $region7: #{tpu_custom_call.1} parent=1 // pred_check_branch
      %21 = sbr.rel (0) target = $region9
    $region8: #{tpu_custom_call.1} parent=1 // pred_region
      %22 = dma.done [#allocation3], 256
    $region9: #{tpu_custom_call.1} parent=1 // pred_fallthru
      _
    %v23 = vld [vmem:[#allocation2] sm:$0xff]
    %v24 = vld [vmem:[#allocation2 + $0x8] sm:$0xff]
    %v25 = vrcp.pop 0.5
    %v26 = vmul.f32 %v23, %v25
    %v27 = vmul.f32 %v24, %v25
    %28 = vst [vmem:[#allocation5] sm:$0xff] %v26
    %29 = vst [vmem:[#allocation5 + $0x8] sm:$0xff] %v27
    // Predicated region
    $region10: #{tpu_custom_call.1} parent=1 // pred_check
      _
    $region11: #{tpu_custom_call.1} parent=1 // pred_check_branch
      %31 = sbr.rel (0) target = $region13
    $region12: #{tpu_custom_call.1} parent=1 // pred_region
      %s33 = ssub.s32 256, 256
      %34 = vsyncadd [#allocation4], %s33
      %s35 = sshll.u32 [#allocation5], 4
      %s36 = int_to_ptr.vmem [resolvable:$true] %s35
      %41 = dma.vmem_to_hbm [thread:$0]  %s36, 256, %s1, [#allocation4], 128, 128, 8
    $region13: #{tpu_custom_call.1} parent=1 // pred_fallthru
      _
    // Predicated region
    $region14: #{tpu_custom_call.1} parent=1 // pred_check
      _
    $region15: #{tpu_custom_call.1} parent=1 // pred_check_branch
      %43 = sbr.rel (0) target = $region17
    $region16: #{tpu_custom_call.1} parent=1 // pred_region
      %44 = dma.done [#allocation4], 256
    $region17: #{tpu_custom_call.1} parent=1 // pred_fallthru
      _
    %45 = vsyncpa [#allocation3], 1
    %46 = vsyncpa [#allocation4], 1

</llo_original>
